<compile_context>
chip_gen: v7x
topology: tpu7x:2x2x1
jax: 0.10.0
libtpu: 0.0.40
codegen_flags: <defaults>
</compile_context>

<pallas_src>
import functools
import math

import jax
import jax.numpy as jnp
from jax.experimental import pallas as pl
from jax.experimental.pallas import tpu as pltpu

EPS = 1e-5


def twod_block_kernel(H, x_ref, wa_ref, w2_ref, bna_ref, bn2_ref, o_ref):
    # x_ref  : (Cin_p, M)          M = N*W*H, h fastest within each (n, w) group
    # wa_ref : (2*Cout_p, 3*Cin_p) rows = [C1 stacked weights ; shortcut weight
    #                              placed in the middle (unshifted) K block]
    # w2_ref : (Cout_p, 3*Cout_p)  C2 stacked weights
    # bna_ref: (2*Cout_p, 2)       col0 = gamma [BN1 ; BNshortcut], col1 = beta
    # bn2_ref: (Cout_p, 2)         col0 = gamma BN2, col1 = beta BN2
    x = x_ref[...]
    cout_p = w2_ref.shape[0]
    M = x.shape[1]
    inv_m = jnp.float32(1.0 / M)

    # Position along the conv (H) axis for every lane; built once, reused.
    h_idx = jax.lax.broadcasted_iota(jnp.int32, (1, M), 1) % H
    not_first = h_idx != 0          # a valid h-1 neighbour exists
    not_last = h_idx != (H - 1)     # a valid h+1 neighbour exists

    def shift_stack(y):
        # (C, M) -> (3C, M): row blocks [y(h-1); y(h); y(h+1)], zero-padded at
        # the H boundaries.  Lane rolls go to the XLU; no extra MXU work.
        m = y.shape[1]
        y_prev = jnp.where(not_first, pltpu.roll(y, 1, axis=1), 0.0)
        y_next = jnp.where(not_last, pltpu.roll(y, m - 1, axis=1), 0.0)
        return jnp.concatenate([y_prev, y, y_next], axis=0)

    def bn(hh, gamma, beta):
        # Training-mode batch norm over M = N*H*W, single-pass (biased) stats,
        # folded into one scale + one shift per channel.
        mu = jnp.sum(hh, axis=1, keepdims=True) * inv_m
        ex2 = jnp.sum(hh * hh, axis=1, keepdims=True) * inv_m
        var = ex2 - mu * mu
        scale = gamma * jax.lax.rsqrt(var + EPS)
        shift = beta - mu * scale
        return hh * scale + shift

    # Stage 1: C1 + shortcut in ONE MXU matmul, BN1 + BNshortcut in one fused
    # reduction over the stacked (2*Cout_p, M) result.
    r = jnp.dot(wa_ref[...], shift_stack(x), preferred_element_type=jnp.float32)
    r = bn(r, bna_ref[:, 0:1], bna_ref[:, 1:2])
    h = jnp.maximum(r[:cout_p], 0.0)     # BN1 -> ReLU   (main branch)
    s = r[cout_p:]                       # BNshortcut    (residual branch)

    # Stage 2: C2 -> BN2.
    h = jnp.dot(w2_ref[...], shift_stack(h), preferred_element_type=jnp.float32)
    h = bn(h, bn2_ref[:, 0:1], bn2_ref[:, 1:2])

    o_ref[...] = jnp.maximum(h + s, 0.0)


def _full_spec(shape):
    nd = len(shape)
    return pl.BlockSpec(shape, lambda i, _nd=nd: (0,) * _nd)


def _round_up(v, m):
    return ((v + m - 1) // m) * m


def twod_block_forward(x_nchw, w1_oihw, w2_oihw, ws_oihw, gamma, beta):
    """x_nchw: (N, Cin, H, W); conv weights in PyTorch OIHW layout;
    gamma/beta: (Cout, 3) with columns [BN1, BN2, BNshortcut]."""
    N, Cin, H, W = x_nchw.shape
    Cout = w1_oihw.shape[0]
    cin_p = _round_up(Cin, 8)
    cout_p = _round_up(Cout, 8)
    M = N * W * H

    # NCHW -> (C, N, W, H) -> (C, M): big axis on lanes, h fastest per (n, w).
    xt = jnp.transpose(x_nchw, (1, 0, 3, 2)).reshape(Cin, M)
    xt = jnp.pad(xt, ((0, cin_p - Cin), (0, 0)))

    def stack_w(w_oihw, cin, cinp):
        # (Cout, Cin, 3, 1) -> (Cout_p, 3*Cin_p), K blocks ordered [h-1, h, h+1].
        w = jnp.transpose(w_oihw[..., 0], (0, 2, 1))          # (Cout, 3, Cin)
        w = jnp.pad(w, ((0, cout_p - Cout), (0, 0), (0, cinp - cin)))
        return w.reshape(cout_p, 3 * cinp)

    w1 = stack_w(w1_oihw, Cin, cin_p)
    w2 = stack_w(w2_oihw, Cout, cout_p)

    # 1x1 shortcut weight lives in the middle ("unshifted") K block; stack it
    # below the C1 weight so conv1 + shortcut share one matmul.
    ws = jnp.pad(ws_oihw[:, :, 0, 0], ((0, cout_p - Cout), (0, cin_p - Cin)))
    zblk = jnp.zeros((cout_p, cin_p), jnp.float32)
    ws3 = jnp.concatenate([zblk, ws, zblk], axis=1)            # (Cout_p, 3*Cin_p)
    wa = jnp.concatenate([w1, ws3], axis=0)                    # (2*Cout_p, 3*Cin_p)

    g = jnp.pad(gamma, ((0, cout_p - Cout), (0, 0)))
    b = jnp.pad(beta, ((0, cout_p - Cout), (0, 0)))
    bna = jnp.stack([jnp.concatenate([g[:, 0], g[:, 2]]),
                     jnp.concatenate([b[:, 0], b[:, 2]])], axis=1)  # (2*Cout_p, 2)
    bn2 = jnp.stack([g[:, 1], b[:, 1]], axis=1)                     # (Cout_p, 2)

    kernel = functools.partial(twod_block_kernel, H)
    out = pl.pallas_call(
        kernel,
        out_shape=jax.ShapeDtypeStruct((cout_p, M), jnp.float32),
        grid=(1,),
        in_specs=[_full_spec(xt.shape), _full_spec(wa.shape), _full_spec(w2.shape),
                  _full_spec(bna.shape), _full_spec(bn2.shape)],
        out_specs=_full_spec((cout_p, M)),
        compiler_params=pltpu.CompilerParams(dimension_semantics=("arbitrary",)),
    )(xt, wa, w2, bna, bn2)

    # (Cout_p, M) -> (Cout, N, W, H) -> NCHW
    out = out[:Cout].reshape(Cout, N, W, H)
    return jnp.transpose(out, (1, 0, 3, 2))


if __name__ == "__main__":
    indim, outdim = 4, 8       # indim != outdim -> 1x1 shortcut branch
    N, H, W = 2, 16, 16
    key = jax.random.PRNGKey(0)
    k1, k2, k3, kx = jax.random.split(key, 4)

    # init_layer: conv weight ~ N(0, sqrt(2 / (kh*kw*out_channels))); BN gamma=1, beta=0
    w1_oihw = jax.random.normal(k1, (outdim, indim, 3, 1), jnp.float32) * math.sqrt(2.0 / (3 * 1 * outdim))
    w2_oihw = jax.random.normal(k2, (outdim, outdim, 3, 1), jnp.float32) * math.sqrt(2.0 / (3 * 1 * outdim))
    ws_oihw = jax.random.normal(k3, (outdim, indim, 1, 1), jnp.float32) * math.sqrt(2.0 / (1 * 1 * outdim))
    gamma = jnp.ones((outdim, 3), jnp.float32)    # BN1 / BN2 / BNshortcut gammas
    beta = jnp.zeros((outdim, 3), jnp.float32)    # betas

    x = jax.random.normal(kx, (N, indim, H, W), jnp.float32)

    out = jax.block_until_ready(
        twod_block_forward(x, w1_oihw, w2_oihw, ws_oihw, gamma, beta))

    # Pure-JAX reference (same semantics as the PyTorch module in training mode).
    def _ref(xr):
        def conv(inp, w, ph):
            return jax.lax.conv_general_dilated(
                inp, w, (1, 1), ((ph, ph), (0, 0)),
                dimension_numbers=('NCHW', 'OIHW', 'NCHW'))

        def bn(h):
            mu = jnp.mean(h, axis=(0, 2, 3), keepdims=True)
            var = jnp.mean((h - mu) ** 2, axis=(0, 2, 3), keepdims=True)
            return (h - mu) * jax.lax.rsqrt(var + EPS)

        h = jax.nn.relu(bn(conv(xr, w1_oihw, 1)))
        h = bn(conv(h, w2_oihw, 1))
        s = bn(conv(xr, ws_oihw, 0))
        return jax.nn.relu(h + s)

    ref = _ref(x)
    assert out.shape == (N, outdim, H, W)
    err = float(jnp.max(jnp.abs(out - ref)))
    assert jnp.allclose(out, ref, atol=1e-4, rtol=1e-4), err
    print("KERNEL_OK")
</pallas_src>

<mosaic_0001>
module attributes {stable_mosaic.version = 11 : i64} {
  func.func @twod_block_kernel(%arg0: i32, %arg1: memref<8x512xf32, #tpu.memory_space<vmem>>, %arg2: memref<16x24xf32, #tpu.memory_space<vmem>>, %arg3: memref<8x24xf32, #tpu.memory_space<vmem>>, %arg4: memref<16x2xf32, #tpu.memory_space<vmem>>, %arg5: memref<8x2xf32, #tpu.memory_space<vmem>>, %arg6: memref<8x512xf32, #tpu.memory_space<vmem>>) attributes {dimension_semantics = [#tpu.dimension_semantics<arbitrary>], iteration_bounds = array<i64: 1>, scalar_prefetch = 0 : i64, scratch_operands = 0 : i64, tpu.core_type = #tpu.core_type<tc>, window_params = [{pipeline_mode = #tpu.pipeline_mode<synchronous>, transform_indices = @transform_0, window_bounds = array<i64: 8, 512>}, {pipeline_mode = #tpu.pipeline_mode<synchronous>, transform_indices = @transform_1, window_bounds = array<i64: 16, 24>}, {pipeline_mode = #tpu.pipeline_mode<synchronous>, transform_indices = @transform_2, window_bounds = array<i64: 8, 24>}, {pipeline_mode = #tpu.pipeline_mode<synchronous>, transform_indices = @transform_3, window_bounds = array<i64: 16, 2>}, {pipeline_mode = #tpu.pipeline_mode<synchronous>, transform_indices = @transform_4, window_bounds = array<i64: 8, 2>}, {pipeline_mode = #tpu.pipeline_mode<synchronous>, transform_indices = @transform_5, window_bounds = array<i64: 8, 512>}]} {
    %c0 = arith.constant 0 : index
    %c0_0 = arith.constant 0 : index
    %0 = vector.load %arg1[%c0, %c0_0] : memref<8x512xf32, #tpu.memory_space<vmem>>, vector<8x512xf32>
    %1 = tpu.iota {dimensions = array<i32: 1>} : vector<1x512xi32>
    %c16_i32 = arith.constant 16 : i32
    %c0_i32 = arith.constant 0 : i32
    %2 = arith.cmpi eq, %c16_i32, %c0_i32 : i32
    %c1_i32 = arith.constant 1 : i32
    %3 = arith.select %2, %c1_i32, %c16_i32 : i32
    %4 = vector.broadcast %3 : i32 to vector<1x512xi32>
    %5 = arith.remsi %1, %4 : vector<1x512xi32>
    %c0_i32_1 = arith.constant 0 : i32
    %6 = vector.broadcast %c0_i32_1 : i32 to vector<1x512xi32>
    %7 = arith.cmpi ne, %5, %6 : vector<1x512xi32>
    %c0_i32_2 = arith.constant 0 : i32
    %8 = vector.broadcast %c0_i32_2 : i32 to vector<1x512xi32>
    %9 = arith.cmpi slt, %5, %8 : vector<1x512xi32>
    %c0_i32_3 = arith.constant 0 : i32
    %10 = arith.cmpi slt, %3, %c0_i32_3 : i32
    %11 = vector.broadcast %10 : i1 to vector<1x512xi1>
    %12 = vector.broadcast %11 : vector<1x512xi1> to vector<1x512xi1>
    %13 = arith.xori %9, %12 : vector<1x512xi1>
    %14 = arith.andi %13, %7 : vector<1x512xi1>
    %15 = vector.broadcast %3 : i32 to vector<1x512xi32>
    %16 = arith.addi %5, %15 : vector<1x512xi32>
    %17 = arith.select %14, %16, %5 : vector<1x512xi1>, vector<1x512xi32>
    %c0_i32_4 = arith.constant 0 : i32
    %18 = vector.broadcast %c0_i32_4 : i32 to vector<1x512xi32>
    %19 = arith.cmpi ne, %17, %18 : vector<1x512xi32>
    %c15_i32 = arith.constant 15 : i32
    %20 = vector.broadcast %c15_i32 : i32 to vector<1x512xi32>
    %21 = arith.cmpi ne, %17, %20 : vector<1x512xi32>
    %c0_5 = arith.constant 0 : index
    %c0_6 = arith.constant 0 : index
    %22 = vector.load %arg2[%c0_5, %c0_6] : memref<16x24xf32, #tpu.memory_space<vmem>>, vector<16x24xf32>
    %c1_i32_7 = arith.constant 1 : i32
    %23 = tpu.dynamic_rotate %0 by %c1_i32_7 dim 1 : vector<8x512xf32>, i32 -> vector<8x512xf32>
    %cst = arith.constant 0.000000e+00 : f32
    %24 = vector.shape_cast %19 : vector<1x512xi1> to vector<1x512xi1>
    %25 = vector.broadcast %24 : vector<1x512xi1> to vector<8x512xi1>
    %26 = vector.broadcast %cst : f32 to vector<8x512xf32>
    %27 = arith.select %25, %23, %26 : vector<8x512xi1>, vector<8x512xf32>
    %c511_i32 = arith.constant 511 : i32
    %28 = tpu.dynamic_rotate %0 by %c511_i32 dim 1 : vector<8x512xf32>, i32 -> vector<8x512xf32>
    %cst_8 = arith.constant 0.000000e+00 : f32
    %29 = vector.shape_cast %21 : vector<1x512xi1> to vector<1x512xi1>
    %30 = vector.broadcast %29 : vector<1x512xi1> to vector<8x512xi1>
    %31 = vector.broadcast %cst_8 : f32 to vector<8x512xf32>
    %32 = arith.select %30, %28, %31 : vector<8x512xi1>, vector<8x512xf32>
    %33 = tpu.concatenate %27, %0, %32 in 0 : vector<8x512xf32>, vector<8x512xf32>, vector<8x512xf32> -> vector<24x512xf32>
    %cst_9 = arith.constant dense<0.000000e+00> : vector<16x512xf32>
    %34 = tpu.matmul %22, %33, %cst_9 {dimension_numbers = #tpu.dot_dimension_numbers<[1], [0], [0], [1], [0, 0, 1, 1], [], []>} : vector<16x24xf32>, vector<24x512xf32>, vector<16x512xf32> -> vector<16x512xf32>
    %c0_10 = arith.constant 0 : index
    %c0_11 = arith.constant 0 : index
    %35 = vector.load %arg4[%c0_10, %c0_11] : memref<16x2xf32, #tpu.memory_space<vmem>>, vector<16x1xf32>
    %c0_12 = arith.constant 0 : index
    %c1 = arith.constant 1 : index
    %36 = vector.load %arg4[%c0_12, %c1] : memref<16x2xf32, #tpu.memory_space<vmem>>, vector<16x1xf32>
    %cst_13 = arith.constant dense<0.000000e+00> : vector<16xf32>
    %37 = vector.multi_reduction <add>, %34, %cst_13 [1] : vector<16x512xf32> to vector<16xf32>
    %38 = vector.shape_cast %37 : vector<16xf32> to vector<16x1xf32>
    %cst_14 = arith.constant 0.001953125 : f32
    %39 = vector.broadcast %cst_14 : f32 to vector<16x1xf32>
    %40 = arith.mulf %38, %39 : vector<16x1xf32>
    %41 = arith.mulf %34, %34 : vector<16x512xf32>
    %cst_15 = arith.constant dense<0.000000e+00> : vector<16xf32>
    %42 = vector.multi_reduction <add>, %41, %cst_15 [1] : vector<16x512xf32> to vector<16xf32>
    %43 = vector.shape_cast %42 : vector<16xf32> to vector<16x1xf32>
    %cst_16 = arith.constant 0.001953125 : f32
    %44 = vector.broadcast %cst_16 : f32 to vector<16x1xf32>
    %45 = arith.mulf %43, %44 : vector<16x1xf32>
    %46 = arith.mulf %40, %40 : vector<16x1xf32>
    %47 = arith.subf %45, %46 : vector<16x1xf32>
    %cst_17 = arith.constant 9.99999974E-6 : f32
    %48 = vector.broadcast %cst_17 : f32 to vector<16x1xf32>
    %49 = arith.addf %47, %48 : vector<16x1xf32>
    %50 = math.rsqrt %49 : vector<16x1xf32>
    %51 = arith.mulf %35, %50 : vector<16x1xf32>
    %52 = arith.mulf %40, %51 : vector<16x1xf32>
    %53 = arith.subf %36, %52 : vector<16x1xf32>
    %54 = vector.broadcast %51 : vector<16x1xf32> to vector<16x512xf32>
    %55 = arith.mulf %34, %54 : vector<16x512xf32>
    %56 = vector.broadcast %53 : vector<16x1xf32> to vector<16x512xf32>
    %57 = arith.addf %55, %56 : vector<16x512xf32>
    %58 = vector.extract_strided_slice %57 {offsets = [0, 0], sizes = [8, 512], strides = [1, 1]} : vector<16x512xf32> to vector<8x512xf32>
    %cst_18 = arith.constant 0.000000e+00 : f32
    %59 = vector.broadcast %cst_18 : f32 to vector<8x512xf32>
    %60 = arith.maximumf %58, %59 : vector<8x512xf32>
    %61 = vector.extract_strided_slice %57 {offsets = [8, 0], sizes = [8, 512], strides = [1, 1]} : vector<16x512xf32> to vector<8x512xf32>
    %c0_19 = arith.constant 0 : index
    %c0_20 = arith.constant 0 : index
    %62 = vector.load %arg3[%c0_19, %c0_20] : memref<8x24xf32, #tpu.memory_space<vmem>>, vector<8x24xf32>
    %c1_i32_21 = arith.constant 1 : i32
    %63 = tpu.dynamic_rotate %60 by %c1_i32_21 dim 1 : vector<8x512xf32>, i32 -> vector<8x512xf32>
    %cst_22 = arith.constant 0.000000e+00 : f32
    %64 = vector.shape_cast %19 : vector<1x512xi1> to vector<1x512xi1>
    %65 = vector.broadcast %64 : vector<1x512xi1> to vector<8x512xi1>
    %66 = vector.broadcast %cst_22 : f32 to vector<8x512xf32>
    %67 = arith.select %65, %63, %66 : vector<8x512xi1>, vector<8x512xf32>
    %c511_i32_23 = arith.constant 511 : i32
    %68 = tpu.dynamic_rotate %60 by %c511_i32_23 dim 1 : vector<8x512xf32>, i32 -> vector<8x512xf32>
    %cst_24 = arith.constant 0.000000e+00 : f32
    %69 = vector.shape_cast %21 : vector<1x512xi1> to vector<1x512xi1>
    %70 = vector.broadcast %69 : vector<1x512xi1> to vector<8x512xi1>
    %71 = vector.broadcast %cst_24 : f32 to vector<8x512xf32>
    %72 = arith.select %70, %68, %71 : vector<8x512xi1>, vector<8x512xf32>
    %73 = tpu.concatenate %67, %60, %72 in 0 : vector<8x512xf32>, vector<8x512xf32>, vector<8x512xf32> -> vector<24x512xf32>
    %cst_25 = arith.constant dense<0.000000e+00> : vector<8x512xf32>
    %74 = tpu.matmul %62, %73, %cst_25 {dimension_numbers = #tpu.dot_dimension_numbers<[1], [0], [0], [1], [0, 0, 1, 1], [], []>} : vector<8x24xf32>, vector<24x512xf32>, vector<8x512xf32> -> vector<8x512xf32>
    %c0_26 = arith.constant 0 : index
    %c0_27 = arith.constant 0 : index
    %75 = vector.load %arg5[%c0_26, %c0_27] : memref<8x2xf32, #tpu.memory_space<vmem>>, vector<8x1xf32>
    %c0_28 = arith.constant 0 : index
    %c1_29 = arith.constant 1 : index
    %76 = vector.load %arg5[%c0_28, %c1_29] : memref<8x2xf32, #tpu.memory_space<vmem>>, vector<8x1xf32>
    %cst_30 = arith.constant dense<0.000000e+00> : vector<8xf32>
    %77 = vector.multi_reduction <add>, %74, %cst_30 [1] : vector<8x512xf32> to vector<8xf32>
    %78 = vector.shape_cast %77 : vector<8xf32> to vector<8x1xf32>
    %cst_31 = arith.constant 0.001953125 : f32
    %79 = vector.broadcast %cst_31 : f32 to vector<8x1xf32>
    %80 = arith.mulf %78, %79 : vector<8x1xf32>
    %81 = arith.mulf %74, %74 : vector<8x512xf32>
    %cst_32 = arith.constant dense<0.000000e+00> : vector<8xf32>
    %82 = vector.multi_reduction <add>, %81, %cst_32 [1] : vector<8x512xf32> to vector<8xf32>
    %83 = vector.shape_cast %82 : vector<8xf32> to vector<8x1xf32>
    %cst_33 = arith.constant 0.001953125 : f32
    %84 = vector.broadcast %cst_33 : f32 to vector<8x1xf32>
    %85 = arith.mulf %83, %84 : vector<8x1xf32>
    %86 = arith.mulf %80, %80 : vector<8x1xf32>
    %87 = arith.subf %85, %86 : vector<8x1xf32>
    %cst_34 = arith.constant 9.99999974E-6 : f32
    %88 = vector.broadcast %cst_34 : f32 to vector<8x1xf32>
    %89 = arith.addf %87, %88 : vector<8x1xf32>
    %90 = math.rsqrt %89 : vector<8x1xf32>
    %91 = arith.mulf %75, %90 : vector<8x1xf32>
    %92 = arith.mulf %80, %91 : vector<8x1xf32>
    %93 = arith.subf %76, %92 : vector<8x1xf32>
    %94 = vector.broadcast %91 : vector<8x1xf32> to vector<8x512xf32>
    %95 = arith.mulf %74, %94 : vector<8x512xf32>
    %96 = vector.broadcast %93 : vector<8x1xf32> to vector<8x512xf32>
    %97 = arith.addf %95, %96 : vector<8x512xf32>
    %98 = arith.addf %97, %61 : vector<8x512xf32>
    %cst_35 = arith.constant 0.000000e+00 : f32
    %99 = vector.broadcast %cst_35 : f32 to vector<8x512xf32>
    %100 = arith.maximumf %98, %99 : vector<8x512xf32>
    %c0_36 = arith.constant 0 : index
    %c0_37 = arith.constant 0 : index
    %101 = vector.load %arg6[%c0_36, %c0_37] : memref<8x512xf32, #tpu.memory_space<vmem>>, vector<8x512xf32>
    tpu.vector_store %arg6[%c0_36, %c0_37], %100 {strides = array<i32>} : memref<8x512xf32, #tpu.memory_space<vmem>>, vector<8x512xf32>,
    return
  }
  func.func @transform_0(%arg0: i32) -> (i32, i32) {
    %c0_i32 = arith.constant 0 : i32
    %c0_i32_0 = arith.constant 0 : i32
    %c0_i32_1 = arith.constant 0 : i32
    return %c0_i32, %c0_i32_0 : i32, i32
  }
  func.func @transform_1(%arg0: i32) -> (i32, i32) {
    %c0_i32 = arith.constant 0 : i32
    %c0_i32_0 = arith.constant 0 : i32
    %c0_i32_1 = arith.constant 0 : i32
    return %c0_i32, %c0_i32_0 : i32, i32
  }
  func.func @transform_2(%arg0: i32) -> (i32, i32) {
    %c0_i32 = arith.constant 0 : i32
    %c0_i32_0 = arith.constant 0 : i32
    %c0_i32_1 = arith.constant 0 : i32
    return %c0_i32, %c0_i32_0 : i32, i32
  }
  func.func @transform_3(%arg0: i32) -> (i32, i32) {
    %c0_i32 = arith.constant 0 : i32
    %c0_i32_0 = arith.constant 0 : i32
    %c0_i32_1 = arith.constant 0 : i32
    return %c0_i32, %c0_i32_0 : i32, i32
  }
  func.func @transform_4(%arg0: i32) -> (i32, i32) {
    %c0_i32 = arith.constant 0 : i32
    %c0_i32_0 = arith.constant 0 : i32
    %c0_i32_1 = arith.constant 0 : i32
    return %c0_i32, %c0_i32_0 : i32, i32
  }
  func.func @transform_5(%arg0: i32) -> (i32, i32) {
    %c0_i32 = arith.constant 0 : i32
    %c0_i32_0 = arith.constant 0 : i32
    %c0_i32_1 = arith.constant 0 : i32
    return %c0_i32, %c0_i32_0 : i32, i32
  }
}

</mosaic_0001>

<llo_original>
// kernel: tpu_custom_call.1
$region0: #{tpu_custom_call.1}
  #allocation0 [shape = 'u32[]', space=smem, size = 0x4, offset = 0x4, fixed_abs, tag = 'smem constant byte address 0x4 - core index']
  #allocation1 [shape = 'u32[144,128]{1,0:T(1,128)}', space=vmem, size = 0x12000, scoped, tag = 'internal scratch']
  %s0 = inlined_call_operand.hbm [shape: f32[8,512], index: 0, kind: input, shape index: {}]
  %s1 = inlined_call_operand.vmem [shape: f32[16,24], index: 1, kind: input, shape index: {}]
  %s2 = inlined_call_operand.vmem [shape: f32[8,24], index: 2, kind: input, shape index: {}]
  %s3 = inlined_call_operand.vmem [shape: f32[16,2], index: 3, kind: input, shape index: {}]
  %s4 = inlined_call_operand.vmem [shape: f32[8,2], index: 4, kind: input, shape index: {}]
  %s5 = inlined_call_operand.hbm [shape: f32[8,512], index: 5, kind: output, shape index: {}]
  %s6 = sld [smem:[#allocation0]]
  $region34: #{tpu_custom_call.1} parent=0
    _
  %s8 = ssub.s32 1, %s6
  %s9 = scalar_select 0, %s8, %s6
  $region1: #{tpu_custom_call.1} parent=0
    #allocation2 [shape = 'u8[16384]{0}', space=vmem, size = 0x4000, scoped, tag = 'input window, operand 0, single buffered']
    #allocation3 [shape = 's32[1]{0}', space=sflag, size = 0x4, scoped, tag = 'scoped memory for tpu_custom_call.1']
    #allocation4 [shape = 's32[1]{0}', space=sflag, size = 0x4, scoped, tag = 'scoped memory for tpu_custom_call.1']
    #allocation5 [shape = 'u8[16384]{0}', space=vmem, size = 0x4000, scoped, tag = 'output window, operand 0, single buffered']
    %10 = vsyncpa [#allocation3], 0
    %11 = vsyncpa [#allocation4], 0
    // Predicated region
    $region2: #{tpu_custom_call.1} parent=1 // pred_check
      _
    $region3: #{tpu_custom_call.1} parent=1 // pred_check_branch
      %13 = sbr.rel (0) target = $region5
    $region4: #{tpu_custom_call.1} parent=1 // pred_region
      %s15 = ssub.s32 512, 512
      %16 = vsyncadd [#allocation3], %s15
      %s18 = sshll.u32 [#allocation2], 4
      %s19 = int_to_ptr.vmem [resolvable:$true] %s18
      %21 = dma.hbm_to_vmem [thread:$0]  %s0, 512, %s19, [#allocation3]
    $region5: #{tpu_custom_call.1} parent=1 // pred_fallthru
      _
    // Predicated region
    $region6: #{tpu_custom_call.1} parent=1 // pred_check
      _
    $region7: #{tpu_custom_call.1} parent=1 // pred_check_branch
      %23 = sbr.rel (0) target = $region9
    $region8: #{tpu_custom_call.1} parent=1 // pred_region
      _
    $region9: #{tpu_custom_call.1} parent=1 // pred_fallthru
      _
    // Predicated region
    $region10: #{tpu_custom_call.1} parent=1 // pred_check
      _
    $region11: #{tpu_custom_call.1} parent=1 // pred_check_branch
      %25 = sbr.rel (0) target = $region13
    $region12: #{tpu_custom_call.1} parent=1 // pred_region
      _
    $region13: #{tpu_custom_call.1} parent=1 // pred_fallthru
      _
    // Predicated region
    $region14: #{tpu_custom_call.1} parent=1 // pred_check
      _
    $region15: #{tpu_custom_call.1} parent=1 // pred_check_branch
      %27 = sbr.rel (0) target = $region17
    $region16: #{tpu_custom_call.1} parent=1 // pred_region
      _
    $region17: #{tpu_custom_call.1} parent=1 // pred_fallthru
      _
    // Predicated region
    $region18: #{tpu_custom_call.1} parent=1 // pred_check
      _
    $region19: #{tpu_custom_call.1} parent=1 // pred_check_branch
      %29 = sbr.rel (0) target = $region21
    $region20: #{tpu_custom_call.1} parent=1 // pred_region
      _
    $region21: #{tpu_custom_call.1} parent=1 // pred_fallthru
      _
    // Predicated region
    $region22: #{tpu_custom_call.1} parent=1 // pred_check
      _
    $region23: #{tpu_custom_call.1} parent=1 // pred_check_branch
      %31 = sbr.rel (0) target = $region25
    $region24: #{tpu_custom_call.1} parent=1 // pred_region
      %32 = dma.done [#allocation3], 512
    $region25: #{tpu_custom_call.1} parent=1 // pred_fallthru
      _
    %v33 = vld [vmem:[#allocation2] sm:$0xff]
    %v34 = vld [vmem:[#allocation2 + $0x8] sm:$0xff]
    %v35 = vld [vmem:[#allocation2 + $0x10] sm:$0xff]
    %v36 = vld [vmem:[#allocation2 + $0x18] sm:$0xff]
    %v37 = vlaneseq
    %v38 = vand.u32 %v37, 127
    %v39 = vadd.s32 %v38, 128
    %v40 = vadd.s32 %v38, 256
    %v41 = vadd.s32 %v38, 384
    %vm42 = vcmp.lt.s32.totalorder %v38, 0
    %v43 = vsub.s32 0, %v38
    %v44 = vsel %vm42, %v43, %v38
    %v45 = vshrl.u32 %v44, 4
    %v46 = vand.u32 %v44, 15
    %v47 = vsub.s32 0, %v46
    %v48 = vsel %vm42, %v47, %v46
    %vm49 = vcmp.lt.s32.totalorder %v39, 0
    %v50 = vsub.s32 0, %v39
    %v51 = vsel %vm49, %v50, %v39
    %v52 = vshrl.u32 %v51, 4
    %v53 = vand.u32 %v51, 15
    %v54 = vsub.s32 0, %v53
    %v55 = vsel %vm49, %v54, %v53
    %vm56 = vcmp.lt.s32.totalorder %v40, 0
    %v57 = vsub.s32 0, %v40
    %v58 = vsel %vm56, %v57, %v40
    %v59 = vshrl.u32 %v58, 4
    %v60 = vand.u32 %v58, 15
    %v61 = vsub.s32 0, %v60
    %v62 = vsel %vm56, %v61, %v60
    %vm63 = vcmp.lt.s32.totalorder %v41, 0
    %v64 = vsub.s32 0, %v41
    %v65 = vsel %vm63, %v64, %v41
    %v66 = vshrl.u32 %v65, 4
    %v67 = vand.u32 %v65, 15
    %v68 = vsub.s32 0, %v67
    %v69 = vsel %vm63, %v68, %v67
    %vm70 = vcmp.ne.s32.totalorder %v48, 0
    %vm71 = vcmp.ne.s32.totalorder %v55, 0
    %vm72 = vcmp.ne.s32.totalorder %v62, 0
    %vm73 = vcmp.ne.s32.totalorder %v69, 0
    %vm74 = vcmp.lt.s32.totalorder %v48, 0
    %vm75 = vcmp.lt.s32.totalorder %v55, 0
    %vm76 = vcmp.lt.s32.totalorder %v62, 0
    %vm77 = vcmp.lt.s32.totalorder %v69, 0
    %vm78 = vmand %vm74, %vm70
    %vm79 = vmand %vm75, %vm71
    %vm80 = vmand %vm76, %vm72
    %vm81 = vmand %vm77, %vm73
    %v82 = vadd.s32 %v48, 16
    %v83 = vadd.s32 %v55, 16
    %v84 = vadd.s32 %v62, 16
    %v85 = vadd.s32 %v69, 16
    %v86 = vsel %vm78, %v82, %v48
    %v87 = vsel %vm79, %v83, %v55
    %v88 = vsel %vm80, %v84, %v62
    %v89 = vsel %vm81, %v85, %v69
    %vm90 = vcmp.ne.s32.totalorder %v86, 0
    %vm91 = vcmp.ne.s32.totalorder %v87, 0
    %vm92 = vcmp.ne.s32.totalorder %v88, 0
    %vm93 = vcmp.ne.s32.totalorder %v89, 0
    %vm94 = vcmp.ne.s32.totalorder %v86, 15
    %vm95 = vcmp.ne.s32.totalorder %v87, 15
    %vm96 = vcmp.ne.s32.totalorder %v88, 15
    %vm97 = vcmp.ne.s32.totalorder %v89, 15
    %v98 = vld [vmem:[%s1] sm:$0xff]
    %v99 = vld [vmem:[%s1 + $0x8] sm:$0xff]
    %100 = vrot.lane.b32.xlu0 %v33, 1
    %v101 = vpop.permute.xlu0 %100
    %102 = vrot.lane.b32.xlu0 %v34, 1
    %v103 = vpop.permute.xlu0 %102
    %104 = vrot.lane.b32.xlu0 %v35, 1
    %v105 = vpop.permute.xlu0 %104
    %106 = vrot.lane.b32.xlu0 %v36, 1
    %v107 = vpop.permute.xlu0 %106
    %vm108 = vcmp.lt.s32.totalorder %v38, 1
    %v109 = vsel %vm108, %v105, %v107
    %v110 = vsel %vm108, %v103, %v105
    %v111 = vsel %vm108, %v101, %v103
    %v112 = vsel %vm108, %v107, %v101
    %v113 = vsel %vm90, 1, 0
    %v114 = vsel %vm91, 1, 0
    %v115 = vsel %vm92, 1, 0
    %v116 = vsel %vm93, 1, 0
    %vm117 = vcmp.eq.s32.totalorder %v113, 1
    %vm118 = vcmp.eq.s32.totalorder %v114, 1
    %vm119 = vcmp.eq.s32.totalorder %v115, 1
    %vm120 = vcmp.eq.s32.totalorder %v116, 1
    %v121 = vsel %vm117, %v112, 0.0
    %v122 = vsel %vm118, %v111, 0.0
    %v123 = vsel %vm119, %v110, 0.0
    %v124 = vsel %vm120, %v109, 0.0
    %125 = vrot.lane.b32.xlu0 %v33, 127
    %v126 = vpop.permute.xlu0 %125
    %127 = vrot.lane.b32.xlu0 %v34, 127
    %v128 = vpop.permute.xlu0 %127
    %129 = vrot.lane.b32.xlu0 %v35, 127
    %v130 = vpop.permute.xlu0 %129
    %131 = vrot.lane.b32.xlu0 %v36, 127
    %v132 = vpop.permute.xlu0 %131
    %vm133 = vcmp.lt.s32.totalorder %v38, 127
    %v134 = vsel %vm133, %v130, %v132
    %v135 = vsel %vm133, %v128, %v130
    %v136 = vsel %vm133, %v126, %v128
    %v137 = vsel %vm133, %v132, %v126
    %v138 = vsel %vm94, 1, 0
    %v139 = vsel %vm95, 1, 0
    %v140 = vsel %vm96, 1, 0
    %v141 = vsel %vm97, 1, 0
    %vm142 = vcmp.eq.s32.totalorder %v138, 1
    %vm143 = vcmp.eq.s32.totalorder %v139, 1
    %vm144 = vcmp.eq.s32.totalorder %v140, 1
    %vm145 = vcmp.eq.s32.totalorder %v141, 1
    %v146 = vsel %vm142, %v136, 0.0
    %v147 = vsel %vm143, %v135, 0.0
    %v148 = vsel %vm144, %v134, 0.0
    %v149 = vsel %vm145, %v137, 0.0
    %vm150 = vcmask 195584
    %v152 = vsel %vm150, %v98, 0
    %v155 = vsel %vm150, %v99, 0
    %157 = vmatprep.subr.mxu0 %v122
    %158 = vmatpush1.msra.mxu0 %v121
    %159 = vmatprep.subr.mxu0 %v34
    %160 = vmatpush1.msra.mxu0 %v33
    %161 = vmatprep.subr.mxu0 %v147
    %162 = vmatpush1.msra.mxu0 %v146
    %163 = vmatprep.subr.mxu0 0.0
    %164 = vmatpush1.msra.mxu0 0.0
    %165 = vmatprep.subr.mxu0 0.0
    %166 = vmatpush1.msra.mxu0 0.0
    %167 = vmatprep.subr.mxu0 0.0
    %168 = vmatpush1.msra.mxu0 0.0
    %169 = vmatprep.subr.mxu0 0.0
    %170 = vmatpush1.msra.mxu0 0.0
    %171 = vmatprep.subr.mxu0 0.0
    %172 = vmatpush1.msra.mxu0 0.0
    %173 = vmatprep.subr.mxu0 0.0
    %174 = vmatpush1.msra.mxu0 0.0
    %175 = vmatprep.subr.mxu0 0.0
    %176 = vmatpush1.msra.mxu0 0.0
    %177 = vmatprep.subr.mxu0 0.0
    %178 = vmatpush1.msra.mxu0 0.0
    %179 = vmatprep.subr.mxu0 0.0
    %180 = vmatpush1.msra.mxu0 0.0
    %181 = vmatprep.subr.mxu0 0.0
    %182 = vmatpush1.msra.mxu0 0.0
    %183 = vmatprep.subr.mxu0 0.0
    %184 = vmatpush1.msra.mxu0 0.0
    %185 = vmatprep.subr.mxu0 0.0
    %186 = vmatpush1.msra.mxu0 0.0
    %187 = vmatprep.subr.mxu0 0.0
    %188 = vmatpush1.msra.mxu0 0.0
    %189 = vmatprep.subr.mxu0 0.0
    %190 = vmatpush1.msra.mxu0 0.0
    %191 = vmatprep.subr.mxu0 0.0
    %192 = vmatpush1.msra.mxu0 0.0
    %193 = vmatprep.subr.mxu0 0.0
    %194 = vmatpush1.msra.mxu0 0.0
    %195 = vmatprep.subr.mxu0 0.0
    %196 = vmatpush1.msra.mxu0 0.0
    %197 = vmatprep.subr.mxu0 0.0
    %198 = vmatpush1.msra.mxu0 0.0
    %199 = vmatprep.subr.mxu0 0.0
    %200 = vmatpush1.msra.mxu0 0.0
    %201 = vmatprep.subr.mxu0 0.0
    %202 = vmatpush1.msra.mxu0 0.0
    %203 = vmatprep.subr.mxu0 0.0
    %204 = vmatpush1.msra.mxu0 0.0
    %205 = vmatprep.subr.mxu0 0.0
    %206 = vmatpush1.msra.mxu0 0.0
    %207 = vmatprep.subr.mxu0 0.0
    %208 = vmatpush1.msra.mxu0 0.0
    %209 = vmatprep.subr.mxu0 0.0
    %210 = vmatpush1.msra.mxu0 0.0
    %211 = vmatprep.subr.mxu0 0.0
    %212 = vmatpush1.msra.mxu0 0.0
    %213 = vmatprep.subr.mxu0 0.0
    %214 = vmatpush1.msra.mxu0 0.0
    %215 = vmatprep.subr.mxu0 0.0
    %216 = vmatpush1.msra.mxu0 0.0
    %217 = vmatprep.subr.mxu0 0.0
    %218 = vmatpush1.msra.mxu0 0.0
    %219 = vmatprep.subr.mxu0 0.0
    %220 = vmatpush1.msra.mxu0 0.0
    %221 = vmatprep.mubr.f32.mxu0 0.0
    %222 = vmatmul.mubr.f32.gmra.mrb[0].mxu0 %v152
    %v223 = vpop.f32.mrb[0].mxu0
    %v224 = vadd.f32 0.0, %v223
    %v225 = vpop.f32.mrb[0].mxu0
    %v226 = vadd.f32 0.0, %v225
    %227 = vmatprep.mubr.f32.mxu0 0.0
    %228 = vmatmul.mubr.f32.gmra.mrb[0].mxu0 %v155
    %v229 = vpop.f32.mrb[0].mxu0
    %v230 = vadd.f32 0.0, %v229
    %v231 = vpop.f32.mrb[0].mxu0
    %v232 = vadd.f32 0.0, %v231
    %233 = vdwg.mxu0
    %234 = vmatprep.subr.mxu0 %v124
    %235 = vmatpush1.msra.mxu0 %v123
    %236 = vmatprep.subr.mxu0 %v36
    %237 = vmatpush1.msra.mxu0 %v35
    %238 = vmatprep.subr.mxu0 %v149
    %239 = vmatpush1.msra.mxu0 %v148
    %240 = vmatprep.subr.mxu0 0.0
    %241 = vmatpush1.msra.mxu0 0.0
    %242 = vmatprep.subr.mxu0 0.0
    %243 = vmatpush1.msra.mxu0 0.0
    %244 = vmatprep.subr.mxu0 0.0
    %245 = vmatpush1.msra.mxu0 0.0
    %246 = vmatprep.subr.mxu0 0.0
    %247 = vmatpush1.msra.mxu0 0.0
    %248 = vmatprep.subr.mxu0 0.0
    %249 = vmatpush1.msra.mxu0 0.0
    %250 = vmatprep.subr.mxu0 0.0
    %251 = vmatpush1.msra.mxu0 0.0
    %252 = vmatprep.subr.mxu0 0.0
    %253 = vmatpush1.msra.mxu0 0.0
    %254 = vmatprep.subr.mxu0 0.0
    %255 = vmatpush1.msra.mxu0 0.0
    %256 = vmatprep.subr.mxu0 0.0
    %257 = vmatpush1.msra.mxu0 0.0
    %258 = vmatprep.subr.mxu0 0.0
    %259 = vmatpush1.msra.mxu0 0.0
    %260 = vmatprep.subr.mxu0 0.0
    %261 = vmatpush1.msra.mxu0 0.0
    %262 = vmatprep.subr.mxu0 0.0
    %263 = vmatpush1.msra.mxu0 0.0
    %264 = vmatprep.subr.mxu0 0.0
    %265 = vmatpush1.msra.mxu0 0.0
    %266 = vmatprep.subr.mxu0 0.0
    %267 = vmatpush1.msra.mxu0 0.0
    %268 = vmatprep.subr.mxu0 0.0
    %269 = vmatpush1.msra.mxu0 0.0
    %270 = vmatprep.subr.mxu0 0.0
    %271 = vmatpush1.msra.mxu0 0.0
    %272 = vmatprep.subr.mxu0 0.0
    %273 = vmatpush1.msra.mxu0 0.0
    %274 = vmatprep.subr.mxu0 0.0
    %275 = vmatpush1.msra.mxu0 0.0
    %276 = vmatprep.subr.mxu0 0.0
    %277 = vmatpush1.msra.mxu0 0.0
    %278 = vmatprep.subr.mxu0 0.0
    %279 = vmatpush1.msra.mxu0 0.0
    %280 = vmatprep.subr.mxu0 0.0
    %281 = vmatpush1.msra.mxu0 0.0
    %282 = vmatprep.subr.mxu0 0.0
    %283 = vmatpush1.msra.mxu0 0.0
    %284 = vmatprep.subr.mxu0 0.0
    %285 = vmatpush1.msra.mxu0 0.0
    %286 = vmatprep.subr.mxu0 0.0
    %287 = vmatpush1.msra.mxu0 0.0
    %288 = vmatprep.subr.mxu0 0.0
    %289 = vmatpush1.msra.mxu0 0.0
    %290 = vmatprep.subr.mxu0 0.0
    %291 = vmatpush1.msra.mxu0 0.0
    %292 = vmatprep.subr.mxu0 0.0
    %293 = vmatpush1.msra.mxu0 0.0
    %294 = vmatprep.subr.mxu0 0.0
    %295 = vmatpush1.msra.mxu0 0.0
    %296 = vmatprep.subr.mxu0 0.0
    %297 = vmatpush1.msra.mxu0 0.0
    %298 = vmatprep.mubr.f32.mxu0 0.0
    %299 = vmatmul.mubr.f32.gmra.mrb[0].mxu0 %v152
    %v300 = vpop.f32.mrb[0].mxu0
    %v301 = vadd.f32 0.0, %v300
    %v302 = vpop.f32.mrb[0].mxu0
    %v303 = vadd.f32 0.0, %v302
    %304 = vmatprep.mubr.f32.mxu0 0.0
    %305 = vmatmul.mubr.f32.gmra.mrb[0].mxu0 %v155
    %v306 = vpop.f32.mrb[0].mxu0
    %v307 = vadd.f32 0.0, %v306
    %v308 = vpop.f32.mrb[0].mxu0
    %v309 = vadd.f32 0.0, %v308
    %310 = vdwg.mxu0
    %v311 = vld [vmem:[%s3] sm:$0xff]
    %v312 = vld [vmem:[%s3 + $0x8] sm:$0xff]
    %v313 = vadd.f32 %v224, %v226
    %v314 = vadd.f32 %v313, %v301
    %v315 = vadd.f32 %v314, %v303
    %316 = vadd.xlane.f32.xlu0 %v315
    %v317 = vpop.xlane.xlu0 %316
    %v318 = vadd.f32 %v230, %v232
    %v319 = vadd.f32 %v318, %v307
    %v320 = vadd.f32 %v319, %v309
    %321 = vadd.xlane.f32.xlu0 %v320
    %v322 = vpop.xlane.xlu0 %321
    %v323 = vmul.f32 %v317, 0.001953125
    %v324 = vmul.f32 %v322, 0.001953125
    %v325 = vmul.f32 %v224, %v224
    %v326 = vmul.f32 %v226, %v226
    %v327 = vmul.f32 %v301, %v301
    %v328 = vmul.f32 %v303, %v303
    %v329 = vmul.f32 %v230, %v230
    %v330 = vmul.f32 %v232, %v232
    %v331 = vmul.f32 %v307, %v307
    %v332 = vmul.f32 %v309, %v309
    %v333 = vadd.f32 %v325, %v326
    %v334 = vadd.f32 %v333, %v327
    %v335 = vadd.f32 %v334, %v328
    %336 = vadd.xlane.f32.xlu0 %v335
    %v337 = vpop.xlane.xlu0 %336
    %v338 = vadd.f32 %v329, %v330
    %v339 = vadd.f32 %v338, %v331
    %v340 = vadd.f32 %v339, %v332
    %341 = vadd.xlane.f32.xlu0 %v340
    %v342 = vpop.xlane.xlu0 %341
    %v343 = vmul.f32 %v337, 0.001953125
    %v344 = vmul.f32 %v342, 0.001953125
    %v345 = vmul.f32 %v323, %v323
    %v346 = vmul.f32 %v324, %v324
    %v347 = vsub.f32 %v343, %v345
    %v348 = vsub.f32 %v344, %v346
    %v349 = vadd.f32 %v347, 1e-05
    %v350 = vadd.f32 %v348, 1e-05
    %v351 = vrsqrt.pop %v349
    %v352 = vrsqrt.pop %v350
    %v353 = vmul.f32 %v311, %v351
    %v354 = vmul.f32 %v312, %v352
    %v355 = vmul.f32 %v323, %v353
    %v356 = vmul.f32 %v324, %v354
    %359 = vrot.lane.b32.xlu0 %v355, 1
    %v360 = vpop.permute.xlu0 %359
    %361 = vrot.lane.b32.xlu0 %v356, 1
    %v362 = vpop.permute.xlu0 %361
    %v365 = vsub.f32 %v311, %v360
    %v366 = vsub.f32 %v312, %v362
    %368 = vset.pattern.permute.xlu0 0
    %369 = vperm.xlu0 %368, %v353
    %v370 = vpop.permute.xlu0 %369
    %373 = vset.pattern.permute.xlu0 0
    %374 = vperm.xlu0 %373, %v354
    %v375 = vpop.permute.xlu0 %374
    %v377 = vmul.f32 %v224, %v370
    %v378 = vmul.f32 %v226, %v370
    %v379 = vmul.f32 %v301, %v370
    %v380 = vmul.f32 %v303, %v370
    %v381 = vmul.f32 %v230, %v375
    %v382 = vmul.f32 %v232, %v375
    %v383 = vmul.f32 %v307, %v375
    %v384 = vmul.f32 %v309, %v375
    %386 = vset.pattern.permute.xlu0 1
    %387 = vperm.xlu0 %386, %v365
    %v388 = vpop.permute.xlu0 %387
    %391 = vset.pattern.permute.xlu0 1
    %392 = vperm.xlu0 %391, %v366
    %v393 = vpop.permute.xlu0 %392
    %v395 = vadd.f32 %v377, %v388
    %v396 = vadd.f32 %v378, %v388
    %v397 = vadd.f32 %v379, %v388
    %v398 = vadd.f32 %v380, %v388
    %v399 = vadd.f32 %v381, %v393
    %v400 = vadd.f32 %v382, %v393
    %v401 = vadd.f32 %v383, %v393
    %v402 = vadd.f32 %v384, %v393
    %v403 = vmax.f32 %v395, 0.0
    %v404 = vmax.f32 %v396, 0.0
    %v405 = vmax.f32 %v397, 0.0
    %v406 = vmax.f32 %v398, 0.0
    %v407 = vld [vmem:[%s2] sm:$0xff]
    %408 = vrot.lane.b32.xlu0 %v403, 1
    %v409 = vpop.permute.xlu0 %408
    %410 = vrot.lane.b32.xlu0 %v404, 1
    %v411 = vpop.permute.xlu0 %410
    %412 = vrot.lane.b32.xlu0 %v405, 1
    %v413 = vpop.permute.xlu0 %412
    %414 = vrot.lane.b32.xlu0 %v406, 1
    %v415 = vpop.permute.xlu0 %414
    %v416 = vsel %vm108, %v413, %v415
    %v417 = vsel %vm108, %v411, %v413
    %v418 = vsel %vm108, %v409, %v411
    %v419 = vsel %vm108, %v415, %v409
    %v420 = vsel %vm117, %v419, 0.0
    %v421 = vsel %vm118, %v418, 0.0
    %v422 = vsel %vm119, %v417, 0.0
    %v423 = vsel %vm120, %v416, 0.0
    %424 = vrot.lane.b32.xlu0 %v403, 127
    %v425 = vpop.permute.xlu0 %424
    %426 = vrot.lane.b32.xlu0 %v404, 127
    %v427 = vpop.permute.xlu0 %426
    %428 = vrot.lane.b32.xlu0 %v405, 127
    %v429 = vpop.permute.xlu0 %428
    %430 = vrot.lane.b32.xlu0 %v406, 127
    %v431 = vpop.permute.xlu0 %430
    %v432 = vsel %vm133, %v429, %v431
    %v433 = vsel %vm133, %v427, %v429
    %v434 = vsel %vm133, %v425, %v427
    %v435 = vsel %vm133, %v431, %v425
    %v436 = vsel %vm142, %v434, 0.0
    %v437 = vsel %vm143, %v433, 0.0
    %v438 = vsel %vm144, %v432, 0.0
    %v439 = vsel %vm145, %v435, 0.0
    %v441 = vsel %vm150, %v407, 0
    %443 = vmatprep.subr.mxu0 %v421
    %444 = vmatpush1.msra.mxu0 %v420
    %445 = vmatprep.subr.mxu0 %v404
    %446 = vmatpush1.msra.mxu0 %v403
    %447 = vmatprep.subr.mxu0 %v437
    %448 = vmatpush1.msra.mxu0 %v436
    %449 = vmatprep.subr.mxu0 0.0
    %450 = vmatpush1.msra.mxu0 0.0
    %451 = vmatprep.subr.mxu0 0.0
    %452 = vmatpush1.msra.mxu0 0.0
    %453 = vmatprep.subr.mxu0 0.0
    %454 = vmatpush1.msra.mxu0 0.0
    %455 = vmatprep.subr.mxu0 0.0
    %456 = vmatpush1.msra.mxu0 0.0
    %457 = vmatprep.subr.mxu0 0.0
    %458 = vmatpush1.msra.mxu0 0.0
    %459 = vmatprep.subr.mxu0 0.0
    %460 = vmatpush1.msra.mxu0 0.0
    %461 = vmatprep.subr.mxu0 0.0
    %462 = vmatpush1.msra.mxu0 0.0
    %463 = vmatprep.subr.mxu0 0.0
    %464 = vmatpush1.msra.mxu0 0.0
    %465 = vmatprep.subr.mxu0 0.0
    %466 = vmatpush1.msra.mxu0 0.0
    %467 = vmatprep.subr.mxu0 0.0
    %468 = vmatpush1.msra.mxu0 0.0
    %469 = vmatprep.subr.mxu0 0.0
    %470 = vmatpush1.msra.mxu0 0.0
    %471 = vmatprep.subr.mxu0 0.0
    %472 = vmatpush1.msra.mxu0 0.0
    %473 = vmatprep.subr.mxu0 0.0
    %474 = vmatpush1.msra.mxu0 0.0
    %475 = vmatprep.subr.mxu0 0.0
    %476 = vmatpush1.msra.mxu0 0.0
    %477 = vmatprep.subr.mxu0 0.0
    %478 = vmatpush1.msra.mxu0 0.0
    %479 = vmatprep.subr.mxu0 0.0
    %480 = vmatpush1.msra.mxu0 0.0
    %481 = vmatprep.subr.mxu0 0.0
    %482 = vmatpush1.msra.mxu0 0.0
    %483 = vmatprep.subr.mxu0 0.0
    %484 = vmatpush1.msra.mxu0 0.0
    %485 = vmatprep.subr.mxu0 0.0
    %486 = vmatpush1.msra.mxu0 0.0
    %487 = vmatprep.subr.mxu0 0.0
    %488 = vmatpush1.msra.mxu0 0.0
    %489 = vmatprep.subr.mxu0 0.0
    %490 = vmatpush1.msra.mxu0 0.0
    %491 = vmatprep.subr.mxu0 0.0
    %492 = vmatpush1.msra.mxu0 0.0
    %493 = vmatprep.subr.mxu0 0.0
    %494 = vmatpush1.msra.mxu0 0.0
    %495 = vmatprep.subr.mxu0 0.0
    %496 = vmatpush1.msra.mxu0 0.0
    %497 = vmatprep.subr.mxu0 0.0
    %498 = vmatpush1.msra.mxu0 0.0
    %499 = vmatprep.subr.mxu0 0.0
    %500 = vmatpush1.msra.mxu0 0.0
    %501 = vmatprep.subr.mxu0 0.0
    %502 = vmatpush1.msra.mxu0 0.0
    %503 = vmatprep.subr.mxu0 0.0
    %504 = vmatpush1.msra.mxu0 0.0
    %505 = vmatprep.subr.mxu0 0.0
    %506 = vmatpush1.msra.mxu0 0.0
    %507 = vmatprep.mubr.f32.mxu0 0.0
    %508 = vmatmul.mubr.f32.gmra.mrb[0].mxu0 %v441
    %v509 = vpop.f32.mrb[0].mxu0
    %v510 = vadd.f32 0.0, %v509
    %v511 = vpop.f32.mrb[0].mxu0
    %v512 = vadd.f32 0.0, %v511
    %513 = vdwg.mxu0
    %514 = vmatprep.subr.mxu0 %v423
    %515 = vmatpush1.msra.mxu0 %v422
    %516 = vmatprep.subr.mxu0 %v406
    %517 = vmatpush1.msra.mxu0 %v405
    %518 = vmatprep.subr.mxu0 %v439
    %519 = vmatpush1.msra.mxu0 %v438
    %520 = vmatprep.subr.mxu0 0.0
    %521 = vmatpush1.msra.mxu0 0.0
    %522 = vmatprep.subr.mxu0 0.0
    %523 = vmatpush1.msra.mxu0 0.0
    %524 = vmatprep.subr.mxu0 0.0
    %525 = vmatpush1.msra.mxu0 0.0
    %526 = vmatprep.subr.mxu0 0.0
    %527 = vmatpush1.msra.mxu0 0.0
    %528 = vmatprep.subr.mxu0 0.0
    %529 = vmatpush1.msra.mxu0 0.0
    %530 = vmatprep.subr.mxu0 0.0
    %531 = vmatpush1.msra.mxu0 0.0
    %532 = vmatprep.subr.mxu0 0.0
    %533 = vmatpush1.msra.mxu0 0.0
    %534 = vmatprep.subr.mxu0 0.0
    %535 = vmatpush1.msra.mxu0 0.0
    %536 = vmatprep.subr.mxu0 0.0
    %537 = vmatpush1.msra.mxu0 0.0
    %538 = vmatprep.subr.mxu0 0.0
    %539 = vmatpush1.msra.mxu0 0.0
    %540 = vmatprep.subr.mxu0 0.0
    %541 = vmatpush1.msra.mxu0 0.0
    %542 = vmatprep.subr.mxu0 0.0
    %543 = vmatpush1.msra.mxu0 0.0
    %544 = vmatprep.subr.mxu0 0.0
    %545 = vmatpush1.msra.mxu0 0.0
    %546 = vmatprep.subr.mxu0 0.0
    %547 = vmatpush1.msra.mxu0 0.0
    %548 = vmatprep.subr.mxu0 0.0
    %549 = vmatpush1.msra.mxu0 0.0
    %550 = vmatprep.subr.mxu0 0.0
    %551 = vmatpush1.msra.mxu0 0.0
    %552 = vmatprep.subr.mxu0 0.0
    %553 = vmatpush1.msra.mxu0 0.0
    %554 = vmatprep.subr.mxu0 0.0
    %555 = vmatpush1.msra.mxu0 0.0
    %556 = vmatprep.subr.mxu0 0.0
    %557 = vmatpush1.msra.mxu0 0.0
    %558 = vmatprep.subr.mxu0 0.0
    %559 = vmatpush1.msra.mxu0 0.0
    %560 = vmatprep.subr.mxu0 0.0
    %561 = vmatpush1.msra.mxu0 0.0
    %562 = vmatprep.subr.mxu0 0.0
    %563 = vmatpush1.msra.mxu0 0.0
    %564 = vmatprep.subr.mxu0 0.0
    %565 = vmatpush1.msra.mxu0 0.0
    %566 = vmatprep.subr.mxu0 0.0
    %567 = vmatpush1.msra.mxu0 0.0
    %568 = vmatprep.subr.mxu0 0.0
    %569 = vmatpush1.msra.mxu0 0.0
    %570 = vmatprep.subr.mxu0 0.0
    %571 = vmatpush1.msra.mxu0 0.0
    %572 = vmatprep.subr.mxu0 0.0
    %573 = vmatpush1.msra.mxu0 0.0
    %574 = vmatprep.subr.mxu0 0.0
    %575 = vmatpush1.msra.mxu0 0.0
    %576 = vmatprep.subr.mxu0 0.0
    %577 = vmatpush1.msra.mxu0 0.0
    %578 = vmatprep.mubr.f32.mxu0 0.0
    %579 = vmatmul.mubr.f32.gmra.mrb[0].mxu0 %v441
    %v580 = vpop.f32.mrb[0].mxu0
    %v581 = vadd.f32 0.0, %v580
    %v582 = vpop.f32.mrb[0].mxu0
    %v583 = vadd.f32 0.0, %v582
    %584 = vdwg.mxu0
    %v585 = vld [vmem:[%s4] sm:$0xff]
    %v586 = vadd.f32 %v510, %v512
    %v587 = vadd.f32 %v586, %v581
    %v588 = vadd.f32 %v587, %v583
    %589 = vadd.xlane.f32.xlu0 %v588
    %v590 = vpop.xlane.xlu0 %589
    %v591 = vmul.f32 %v590, 0.001953125
    %v592 = vmul.f32 %v510, %v510
    %v593 = vmul.f32 %v512, %v512
    %v594 = vmul.f32 %v581, %v581
    %v595 = vmul.f32 %v583, %v583
    %v596 = vadd.f32 %v592, %v593
    %v597 = vadd.f32 %v596, %v594
    %v598 = vadd.f32 %v597, %v595
    %599 = vadd.xlane.f32.xlu0 %v598
    %v600 = vpop.xlane.xlu0 %599
    %v601 = vmul.f32 %v600, 0.001953125
    %v602 = vmul.f32 %v591, %v591
    %v603 = vsub.f32 %v601, %v602
    %v604 = vadd.f32 %v603, 1e-05
    %v605 = vrsqrt.pop %v604
    %v606 = vmul.f32 %v585, %v605
    %v607 = vmul.f32 %v591, %v606
    %609 = vrot.lane.b32.xlu0 %v607, 1
    %v610 = vpop.permute.xlu0 %609
    %v612 = vsub.f32 %v585, %v610
    %614 = vset.pattern.permute.xlu0 0
    %615 = vperm.xlu0 %614, %v606
    %v616 = vpop.permute.xlu0 %615
    %v618 = vmul.f32 %v510, %v616
    %v619 = vmul.f32 %v512, %v616
    %v620 = vmul.f32 %v581, %v616
    %v621 = vmul.f32 %v583, %v616
    %623 = vset.pattern.permute.xlu0 1
    %624 = vperm.xlu0 %623, %v612
    %v625 = vpop.permute.xlu0 %624
    %v627 = vadd.f32 %v618, %v625
    %v628 = vadd.f32 %v619, %v625
    %v629 = vadd.f32 %v620, %v625
    %v630 = vadd.f32 %v621, %v625
    %v631 = vadd.f32 %v627, %v399
    %v632 = vadd.f32 %v628, %v400
    %v633 = vadd.f32 %v629, %v401
    %v634 = vadd.f32 %v630, %v402
    %v635 = vmax.f32 %v631, 0.0
    %v636 = vmax.f32 %v632, 0.0
    %v637 = vmax.f32 %v633, 0.0
    %v638 = vmax.f32 %v634, 0.0
    %639 = vst [vmem:[#allocation5] sm:$0xff] %v635
    %640 = vst [vmem:[#allocation5 + $0x8] sm:$0xff] %v636
    %641 = vst [vmem:[#allocation5 + $0x10] sm:$0xff] %v637
    %642 = vst [vmem:[#allocation5 + $0x18] sm:$0xff] %v638
    // Predicated region
    $region26: #{tpu_custom_call.1} parent=1 // pred_check
      _
    $region27: #{tpu_custom_call.1} parent=1 // pred_check_branch
      %644 = sbr.rel (0) target = $region29
    $region28: #{tpu_custom_call.1} parent=1 // pred_region
      %s646 = ssub.s32 512, 512
      %647 = vsyncadd [#allocation4], %s646
      %s649 = sshll.u32 [#allocation5], 4
      %s650 = int_to_ptr.vmem [resolvable:$true] %s649
      %652 = dma.vmem_to_hbm [thread:$0]  %s650, 512, %s5, [#allocation4]
    $region29: #{tpu_custom_call.1} parent=1 // pred_fallthru
      _
    // Predicated region
    $region30: #{tpu_custom_call.1} parent=1 // pred_check
      _
    $region31: #{tpu_custom_call.1} parent=1 // pred_check_branch
      %654 = sbr.rel (0) target = $region33
    $region32: #{tpu_custom_call.1} parent=1 // pred_region
      %655 = dma.done [#allocation4], 512
    $region33: #{tpu_custom_call.1} parent=1 // pred_fallthru
      _
    %656 = vsyncpa [#allocation3], 1
    %657 = vsyncpa [#allocation4], 1

</llo_original>
